<compile_context>
chip_gen: v7x
topology: tpu7x:2x2x1
jax: 0.10.0
libtpu: 0.0.40
codegen_flags: <defaults>
</compile_context>

<pallas_src>
import jax
import jax.numpy as jnp
from jax import lax
from jax.experimental import pallas as pl
from jax.experimental.pallas import tpu as pltpu

EPS = 1e-5
SLOPE = 0.2
KSIZE = 4
STRIDE = 2
PAD = 1
VMEM_LIMIT = 48 * 1024 * 1024  # explicit scoped-VMEM limit for both pallas_calls


def _round_up(x, m):
    return ((x + m - 1) // m) * m


def _mxu_granularity():
    # v6e / v7x MXUs are 2x(256x256): prefer 256-wide K/N/M tiles when the
    # problem is big enough.  v5e & older (128x128 MXUs) stay at 128.
    try:
        kind = jax.devices()[0].device_kind.lower()
    except Exception:
        return 128
    return 256 if ("v6" in kind or "v7" in kind or "7x" in kind) else 128


# ---------------------------------------------------------------------------
# Phase 1: K-tiled conv-as-matmul + per-channel sum / sum-of-squares.
# grid = (NC, num_M_tiles_per_slice, num_K_tiles)
# ---------------------------------------------------------------------------
def _conv_stats_kernel(p_ref, w_ref, y_ref, stats_ref, acc_ref):
    # p_ref:     (TM, tk)    bf16  im2col rows (zero-padded rows/cols contribute 0)
    # w_ref:     (tk, Np)    bf16  conv weight slab, (K, N) layout
    # y_ref:     (TM, Np)    bf16  conv output tile (pre-BN), written at k==last
    # stats_ref: (1, 2, Np)  f32   per-slice resident accumulator (sum, sumsq)
    # acc_ref:   (TM, Np)    f32   VMEM matmul accumulator scratch
    i = pl.program_id(1)
    k = pl.program_id(2)
    nk = pl.num_programs(2)

    @pl.when(k == 0)
    def _():
        acc_ref[...] = jnp.zeros_like(acc_ref)

    acc_ref[...] += jnp.dot(p_ref[...], w_ref[...],
                            preferred_element_type=jnp.float32)

    @pl.when(k == nk - 1)
    def _():
        y = acc_ref[...]
        y_ref[...] = y.astype(y_ref.dtype)            # bf16 store: half the bytes
        s = jnp.sum(y, axis=0, keepdims=True)         # (1, Np), from f32 y
        ss = jnp.sum(y * y, axis=0, keepdims=True)    # (1, Np)

        @pl.when(i == 0)
        def _():
            stats_ref[...] = jnp.zeros_like(stats_ref)

        stats_ref[0:1, 0:1, :] += s[None]
        stats_ref[0:1, 1:2, :] += ss[None]


# ---------------------------------------------------------------------------
# Phase 2: BatchNorm (batch stats, biased var, eps=1e-5) + affine + LeakyReLU.
# ---------------------------------------------------------------------------
def _make_bn_lrelu_kernel(inv_m, n_core):
    def bn_lrelu_kernel(y_ref, stats_ref, gamma_ref, beta_ref, o_ref):
        st = stats_ref[0]                       # (2, Np)
        for c in range(1, n_core):              # combine per-core partial stats
            st = st + stats_ref[c]
        mean = st[0:1, :] * inv_m               # (1, Np)
        ex2 = st[1:2, :] * inv_m
        var = ex2 - mean * mean                 # biased variance (BN train mode)
        inv_std = lax.rsqrt(var + EPS)
        scale = gamma_ref[...] * inv_std
        shift = beta_ref[...] - mean * scale
        z = y_ref[...].astype(jnp.float32) * scale + shift
        o_ref[...] = jnp.where(z >= 0, z, SLOPE * z).astype(o_ref.dtype)

    return bn_lrelu_kernel


# ---------------------------------------------------------------------------
# Host wrapper.
# ---------------------------------------------------------------------------
def dcgan_conv_forward(x, weight, bias, gamma, beta, nchw_output=True):
    """x: (B, nin, H, W) NCHW; weight: (nout, nin, 4, 4); bias/gamma/beta: (nout,).

    Returns bf16 output (NCHW by default; set nchw_output=False to keep NHWC and
    skip the layout round trip when the consumer can take NHWC)."""
    B, C, H, W = x.shape
    n_out = weight.shape[0]
    OH = (H + 2 * PAD - KSIZE) // STRIDE + 1
    OW = (W + 2 * PAD - KSIZE) // STRIDE + 1
    M = B * OH * OW
    K = C * KSIZE * KSIZE
    gran = _mxu_granularity()

    # --- im2col glue in bf16 (K ordered C, KH, KW to match flattened OIHW) ---
    xb = x.astype(jnp.bfloat16)
    xpad = jnp.pad(xb, ((0, 0), (0, 0), (PAD, PAD), (PAD, PAD)))
    rows = []
    for kh in range(KSIZE):
        cols = []
        for kw in range(KSIZE):
            cols.append(xpad[:, :, kh:kh + STRIDE * OH:STRIDE,
                             kw:kw + STRIDE * OW:STRIDE])         # (B, C, OH, OW)
        rows.append(jnp.stack(cols, axis=-1))                     # (B, C, OH, OW, KW)
    patches = jnp.stack(rows, axis=-2)                            # (B, C, OH, OW, KH, KW)
    patches = jnp.transpose(patches, (0, 2, 3, 1, 4, 5)).reshape(M, K)

    # --- tiling: lane-dense N, K-tiles, M-tiles, optional megacore split -----
    Np = _round_up(n_out, gran if n_out >= gran else 128)
    Kp = _round_up(K, gran if K >= gran else 128)
    tk = min(512, Kp)
    Kp = _round_up(Kp, tk)
    nk = Kp // tk

    TM = min(512, _round_up(M, gran if M >= gran else 128))
    nm = pl.cdiv(M, TM)
    NC = 2 if nm >= 2 else 1            # per-slice stats -> megacore-safe on v7x
    npc = pl.cdiv(nm, NC)
    Mp = NC * npc * TM

    patches_p = jnp.pad(patches, ((0, Mp - M), (0, Kp - K)))       # zero pad: exact
    w_mat = weight.reshape(n_out, K).T                             # (K, N)
    w_mat = jnp.pad(w_mat, ((0, Kp - K), (0, Np - n_out))).astype(jnp.bfloat16)
    gamma_p = jnp.pad(gamma.astype(jnp.float32), (0, Np - n_out)).reshape(1, Np)
    beta_p = jnp.pad(beta.astype(jnp.float32), (0, Np - n_out)).reshape(1, Np)
    del bias  # exactly cancelled by training-mode BN's mean subtraction

    # --- phase 1: tiled conv matmul + per-channel sum / sumsq ----------------
    y, stats = pl.pallas_call(
        _conv_stats_kernel,
        out_shape=(jax.ShapeDtypeStruct((Mp, Np), jnp.bfloat16),
                   jax.ShapeDtypeStruct((NC, 2, Np), jnp.float32)),
        grid=(NC, npc, nk),
        in_specs=[
            pl.BlockSpec((TM, tk), lambda c, i, k: (c * npc + i, k)),
            pl.BlockSpec((tk, Np), lambda c, i, k: (k, 0)),
        ],
        out_specs=(
            pl.BlockSpec((TM, Np), lambda c, i, k: (c * npc + i, 0)),
            pl.BlockSpec((1, 2, Np), lambda c, i, k: (c, 0, 0)),   # per-slice resident
        ),
        scratch_shapes=[pltpu.VMEM((TM, Np), jnp.float32)],
        compiler_params=pltpu.CompilerParams(
            dimension_semantics=("parallel", "arbitrary", "arbitrary"),
            vmem_limit_bytes=VMEM_LIMIT),
    )(patches_p, w_mat)

    # --- phase 2: BN normalize + affine + LeakyReLU (elementwise, parallel) ---
    nm_total = Mp // TM
    out = pl.pallas_call(
        _make_bn_lrelu_kernel(1.0 / M, NC),
        out_shape=jax.ShapeDtypeStruct((Mp, Np), jnp.bfloat16),
        grid=(nm_total,),
        in_specs=[
            pl.BlockSpec((TM, Np), lambda i: (i, 0)),
            pl.BlockSpec((NC, 2, Np), lambda i: (0, 0, 0)),
            pl.BlockSpec((1, Np), lambda i: (0, 0)),
            pl.BlockSpec((1, Np), lambda i: (0, 0)),
        ],
        out_specs=pl.BlockSpec((TM, Np), lambda i: (i, 0)),
        compiler_params=pltpu.CompilerParams(
            dimension_semantics=("parallel",),
            vmem_limit_bytes=VMEM_LIMIT),
    )(y, stats, gamma_p, beta_p)

    out = out[:M, :n_out].reshape(B, OH, OW, n_out)
    if nchw_output:
        out = jnp.transpose(out, (0, 3, 1, 2))   # PyTorch NCHW; skip when possible
    return out


# ---------------------------------------------------------------------------
# Pure-JAX reference (same bf16 rounding of the conv operands as the kernel).
# ---------------------------------------------------------------------------
def _reference(x, weight, bias, gamma, beta):
    xb = x.astype(jnp.bfloat16).astype(jnp.float32)
    wb = weight.astype(jnp.bfloat16).astype(jnp.float32)
    y = lax.conv_general_dilated(
        xb, wb, window_strides=(STRIDE, STRIDE),
        padding=((PAD, PAD), (PAD, PAD)),
        dimension_numbers=("NCHW", "OIHW", "NCHW"),
    ) + bias[None, :, None, None]
    mean = jnp.mean(y, axis=(0, 2, 3), keepdims=True)
    var = jnp.mean((y - mean) ** 2, axis=(0, 2, 3), keepdims=True)
    z = (y - mean) * lax.rsqrt(var + EPS) * gamma[None, :, None, None] \
        + beta[None, :, None, None]
    return jnp.where(z >= 0, z, SLOPE * z)


if __name__ == "__main__":
    B, nin, nout, H, W = 2, 4, 8, 16, 16

    key = jax.random.PRNGKey(0)
    kx, kw, kb = jax.random.split(key, 3)
    x = jax.random.normal(kx, (B, nin, H, W), jnp.float32)
    weight = 0.05 * jax.random.normal(kw, (nout, nin, KSIZE, KSIZE), jnp.float32)
    bias = 0.01 * jax.random.normal(kb, (nout,), jnp.float32)
    gamma = jnp.ones((nout,), jnp.float32)   # BatchNorm2d affine init
    beta = jnp.zeros((nout,), jnp.float32)

    out = jax.block_until_ready(dcgan_conv_forward(x, weight, bias, gamma, beta))
    assert out.shape == (B, nout, H // 2, W // 2), out.shape

    ref = _reference(x, weight, bias, gamma, beta)
    err = float(jnp.max(jnp.abs(out.astype(jnp.float32) - ref)))
    # tolerance covers bf16 MXU operands + bf16 y/out stores + fp reassociation
    assert err < 5e-2, err

    print("KERNEL_OK")
</pallas_src>

<mosaic_0001>
module attributes {stable_mosaic.version = 11 : i64} {
  func.func @_conv_stats_kernel(%arg0: i32, %arg1: i32, %arg2: i32, %arg3: memref<128x128xbf16, #tpu.memory_space<vmem>>, %arg4: memref<128x128xbf16, #tpu.memory_space<vmem>>, %arg5: memref<128x128xbf16, #tpu.memory_space<vmem>>, %arg6: memref<1x2x128xf32, #tpu.memory_space<vmem>>, %arg7: memref<128x128xf32, #tpu.memory_space<vmem>>) attributes {dimension_semantics = [#tpu.dimension_semantics<parallel>, #tpu.dimension_semantics<arbitrary>, #tpu.dimension_semantics<arbitrary>], iteration_bounds = array<i64: 1, 1, 1>, scalar_prefetch = 0 : i64, scratch_operands = 1 : i64, tpu.core_type = #tpu.core_type<tc>, window_params = [{transform_indices = @transform_0, window_bounds = array<i64: 128, 128>}, {transform_indices = @transform_1, window_bounds = array<i64: 128, 128>}, {transform_indices = @transform_2, window_bounds = array<i64: 128, 128>}, {transform_indices = @transform_3, window_bounds = array<i64: 1, 2, 128>}]} {
    %c0_i32 = arith.constant 0 : i32
    %0 = arith.cmpi eq, %arg2, %c0_i32 : i32
    %1 = arith.extui %0 : i1 to i32
    %c0_i32_0 = arith.constant 0 : i32
    %2 = arith.cmpi ne, %1, %c0_i32_0 : i32
    scf.if %2 {
      %cst_10 = arith.constant 0.000000e+00 : f32
      %12 = vector.broadcast %cst_10 : f32 to vector<128x128xf32>
      %c0_11 = arith.constant 0 : index
      %c0_12 = arith.constant 0 : index
      %13 = vector.load %arg7[%c0_11, %c0_12] : memref<128x128xf32, #tpu.memory_space<vmem>>, vector<128x128xf32>
      tpu.vector_store %arg7[%c0_11, %c0_12], %12 {strides = array<i32>} : memref<128x128xf32, #tpu.memory_space<vmem>>, vector<128x128xf32>,
    } else {
    }
    %c0 = arith.constant 0 : index
    %c0_1 = arith.constant 0 : index
    %3 = vector.load %arg7[%c0, %c0_1] : memref<128x128xf32, #tpu.memory_space<vmem>>, vector<128x128xf32>
    %c0_2 = arith.constant 0 : index
    %c0_3 = arith.constant 0 : index
    %4 = vector.load %arg3[%c0_2, %c0_3] : memref<128x128xbf16, #tpu.memory_space<vmem>>, vector<128x128xbf16>
    %c0_4 = arith.constant 0 : index
    %c0_5 = arith.constant 0 : index
    %5 = vector.load %arg4[%c0_4, %c0_5] : memref<128x128xbf16, #tpu.memory_space<vmem>>, vector<128x128xbf16>
    %cst = arith.constant dense<0.000000e+00> : vector<128x128xf32>
    %6 = tpu.matmul %4, %5, %cst {dimension_numbers = #tpu.dot_dimension_numbers<[1], [0], [0], [1], [0, 0, 1, 1], [], []>} : vector<128x128xbf16>, vector<128x128xbf16>, vector<128x128xf32> -> vector<128x128xf32>
    %7 = arith.addf %3, %6 : vector<128x128xf32>
    %c0_6 = arith.constant 0 : index
    %c0_7 = arith.constant 0 : index
    %8 = vector.load %arg7[%c0_6, %c0_7] : memref<128x128xf32, #tpu.memory_space<vmem>>, vector<128x128xf32>
    tpu.vector_store %arg7[%c0_6, %c0_7], %7 {strides = array<i32>} : memref<128x128xf32, #tpu.memory_space<vmem>>, vector<128x128xf32>,
    %c0_i32_8 = arith.constant 0 : i32
    %9 = arith.cmpi eq, %arg2, %c0_i32_8 : i32
    %10 = arith.extui %9 : i1 to i32
    %c0_i32_9 = arith.constant 0 : i32
    %11 = arith.cmpi ne, %10, %c0_i32_9 : i32
    scf.if %11 {
      %c0_10 = arith.constant 0 : index
      %c0_11 = arith.constant 0 : index
      %12 = vector.load %arg7[%c0_10, %c0_11] : memref<128x128xf32, #tpu.memory_space<vmem>>, vector<128x128xf32>
      %13 = arith.truncf %12 : vector<128x128xf32> to vector<128x128xbf16>
      %c0_12 = arith.constant 0 : index
      %c0_13 = arith.constant 0 : index
      %14 = vector.load %arg5[%c0_12, %c0_13] : memref<128x128xbf16, #tpu.memory_space<vmem>>, vector<128x128xbf16>
      tpu.vector_store %arg5[%c0_12, %c0_13], %13 {strides = array<i32>} : memref<128x128xbf16, #tpu.memory_space<vmem>>, vector<128x128xbf16>,
      %cst_14 = arith.constant dense<0.000000e+00> : vector<128xf32>
      %15 = vector.multi_reduction <add>, %12, %cst_14 [0] : vector<128x128xf32> to vector<128xf32>
      %16 = vector.shape_cast %15 : vector<128xf32> to vector<1x128xf32>
      %17 = arith.mulf %12, %12 : vector<128x128xf32>
      %cst_15 = arith.constant dense<0.000000e+00> : vector<128xf32>
      %18 = vector.multi_reduction <add>, %17, %cst_15 [0] : vector<128x128xf32> to vector<128xf32>
      %19 = vector.shape_cast %18 : vector<128xf32> to vector<1x128xf32>
      %c0_i32_16 = arith.constant 0 : i32
      %20 = arith.cmpi eq, %arg1, %c0_i32_16 : i32
      %21 = arith.extui %20 : i1 to i32
      %c0_i32_17 = arith.constant 0 : i32
      %22 = arith.cmpi ne, %21, %c0_i32_17 : i32
      scf.if %22 {
        %cst_29 = arith.constant 0.000000e+00 : f32
        %31 = vector.broadcast %cst_29 : f32 to vector<1x2x128xf32>
        %c0_30 = arith.constant 0 : index
        %c0_31 = arith.constant 0 : index
        %c0_32 = arith.constant 0 : index
        %32 = vector.load %arg6[%c0_30, %c0_31, %c0_32] : memref<1x2x128xf32, #tpu.memory_space<vmem>>, vector<1x2x128xf32>
        tpu.vector_store %arg6[%c0_30, %c0_31, %c0_32], %31 {strides = array<i32>} : memref<1x2x128xf32, #tpu.memory_space<vmem>>, vector<1x2x128xf32>,
      } else {
      }
      %c0_18 = arith.constant 0 : index
      %c0_19 = arith.constant 0 : index
      %c0_20 = arith.constant 0 : index
      %23 = vector.load %arg6[%c0_18, %c0_19, %c0_20] : memref<1x2x128xf32, #tpu.memory_space<vmem>>, vector<1x1x128xf32>
      %24 = vector.shape_cast %16 : vector<1x128xf32> to vector<1x1x128xf32>
      %25 = arith.addf %23, %24 : vector<1x1x128xf32>
      %c0_21 = arith.constant 0 : index
      %c0_22 = arith.constant 0 : index
      %c0_23 = arith.constant 0 : index
      %26 = vector.load %arg6[%c0_21, %c0_22, %c0_23] : memref<1x2x128xf32, #tpu.memory_space<vmem>>, vector<1x1x128xf32>
      tpu.vector_store %arg6[%c0_21, %c0_22, %c0_23], %25 {strides = array<i32>} : memref<1x2x128xf32, #tpu.memory_space<vmem>>, vector<1x1x128xf32>,
      %c0_24 = arith.constant 0 : index
      %c1 = arith.constant 1 : index
      %c0_25 = arith.constant 0 : index
      %27 = vector.load %arg6[%c0_24, %c1, %c0_25] : memref<1x2x128xf32, #tpu.memory_space<vmem>>, vector<1x1x128xf32>
      %28 = vector.shape_cast %19 : vector<1x128xf32> to vector<1x1x128xf32>
      %29 = arith.addf %27, %28 : vector<1x1x128xf32>
      %c0_26 = arith.constant 0 : index
      %c1_27 = arith.constant 1 : index
      %c0_28 = arith.constant 0 : index
      %30 = vector.load %arg6[%c0_26, %c1_27, %c0_28] : memref<1x2x128xf32, #tpu.memory_space<vmem>>, vector<1x1x128xf32>
      tpu.vector_store %arg6[%c0_26, %c1_27, %c0_28], %29 {strides = array<i32>} : memref<1x2x128xf32, #tpu.memory_space<vmem>>, vector<1x1x128xf32>,
    } else {
    }
    return
  }
  func.func @transform_0(%arg0: i32, %arg1: i32, %arg2: i32) -> (i32, i32) {
    %c1_i32 = arith.constant 1 : i32
    %0 = arith.muli %arg0, %c1_i32 : i32
    %1 = arith.addi %0, %arg1 : i32
    %c0_i32 = arith.constant 0 : i32
    return %1, %arg2 : i32, i32
  }
  func.func @transform_1(%arg0: i32, %arg1: i32, %arg2: i32) -> (i32, i32) {
    %c0_i32 = arith.constant 0 : i32
    %c0_i32_0 = arith.constant 0 : i32
    return %arg2, %c0_i32 : i32, i32
  }
  func.func @transform_2(%arg0: i32, %arg1: i32, %arg2: i32) -> (i32, i32) {
    %c1_i32 = arith.constant 1 : i32
    %0 = arith.muli %arg0, %c1_i32 : i32
    %1 = arith.addi %0, %arg1 : i32
    %c0_i32 = arith.constant 0 : i32
    %c0_i32_0 = arith.constant 0 : i32
    return %1, %c0_i32 : i32, i32
  }
  func.func @transform_3(%arg0: i32, %arg1: i32, %arg2: i32) -> (i32, i32, i32) {
    %c0_i32 = arith.constant 0 : i32
    %c0_i32_0 = arith.constant 0 : i32
    %c0_i32_1 = arith.constant 0 : i32
    return %arg0, %c0_i32, %c0_i32_0 : i32, i32, i32
  }
}

</mosaic_0001>

<llo_original>
// kernel: tpu_custom_call.1
$region0: #{tpu_custom_call.1}
  #allocation0 [shape = 'u32[]', space=smem, size = 0x4, offset = 0x4, fixed_abs, tag = 'smem constant byte address 0x4 - core index']
  #allocation1 [shape = 'u32[144,128]{1,0:T(1,128)}', space=vmem, size = 0x12000, scoped, tag = 'internal scratch']
  #allocation2 [shape = 'f32[128,128]{1,0:T(8,128)}', space=vmem, size = 0x10000, scoped, tag = 'scratch operand']
  %s0 = inlined_call_operand.hbm [shape: bf16[128,128], index: 0, kind: input, shape index: {}]
  %s1 = inlined_call_operand.hbm [shape: bf16[128,128], index: 1, kind: input, shape index: {}]
  %s2 = inlined_call_operand.hbm [shape: bf16[128,128], index: 2, kind: output, shape index: {0}]
  %s3 = inlined_call_operand.hbm [shape: f32[1,2,128], index: 3, kind: output, shape index: {1}]
  %4 = xla_tuple %s2, %s3
  %s5 = sld [smem:[#allocation0]]
  $region46: #{tpu_custom_call.1} parent=0
    _
  %s7 = ssub.s32 1, %s5
  %s8 = scalar_select 0, %s7, %s5
  $region1: #{tpu_custom_call.1} parent=0
    #allocation3 [shape = 'u8[32768]{0}', space=vmem, size = 0x8000, scoped, tag = 'input window, operand 0, single buffered']
    #allocation4 [shape = 's32[1]{0}', space=sflag, size = 0x4, scoped, tag = 'scoped memory for tpu_custom_call.1']
    #allocation5 [shape = 's32[1]{0}', space=sflag, size = 0x4, scoped, tag = 'scoped memory for tpu_custom_call.1']
    #allocation6 [shape = 'u8[32768]{0}', space=vmem, size = 0x8000, scoped, tag = 'input window, operand 1, single buffered']
    #allocation7 [shape = 's32[1]{0}', space=sflag, size = 0x4, scoped, tag = 'scoped memory for tpu_custom_call.1']
    #allocation8 [shape = 'u8[32768]{0}', space=vmem, size = 0x8000, scoped, tag = 'output window, operand 0, single buffered']
    #allocation9 [shape = 'u8[1024]{0}', space=vmem, size = 0x400, scoped, tag = 'output window, operand 1, single buffered']
    #allocation10 [shape = 's32[1]{0}', space=sflag, size = 0x4, scoped, tag = 'scoped memory for tpu_custom_call.1']
    %9 = vsyncpa [#allocation4], 0
    %10 = vsyncpa [#allocation7], 0
    %11 = vsyncpa [#allocation5], 0
    %12 = vsyncpa [#allocation10], 0
    // Predicated region
    $region2: #{tpu_custom_call.1} parent=1 // pred_check
      _
    $region3: #{tpu_custom_call.1} parent=1 // pred_check_branch
      %14 = sbr.rel (0) target = $region5
    $region4: #{tpu_custom_call.1} parent=1 // pred_region
      %s15 = sadd.s32 0, 0
      %s16 = smul.u32 16, %s15
      %s18 = ssub.s32 1024, 1024
      %19 = vsyncadd [#allocation4], %s18
      %s20 = smul.addr %s16, 64
      %s21 = scalar_lea.hbm %s0, %s20
      %s22 = sshll.u32 [#allocation3], 4
      %s23 = int_to_ptr.vmem [resolvable:$true] %s22
      %28 = dma.hbm_to_vmem [thread:$0]  %s21, 1024, %s23, [#allocation4], 64, 64, 4
    $region5: #{tpu_custom_call.1} parent=1 // pred_fallthru
      _
    // Predicated region
    $region6: #{tpu_custom_call.1} parent=1 // pred_check
      _
    $region7: #{tpu_custom_call.1} parent=1 // pred_check_branch
      %30 = sbr.rel (0) target = $region9
    $region8: #{tpu_custom_call.1} parent=1 // pred_region
      %s32 = ssub.s32 1024, 1024
      %33 = vsyncadd [#allocation7], %s32
      %s34 = sshll.u32 [#allocation6], 4
      %s35 = int_to_ptr.vmem [resolvable:$true] %s34
      %40 = dma.hbm_to_vmem [thread:$0]  %s1, 1024, %s35, [#allocation7], 64, 64, 4
    $region9: #{tpu_custom_call.1} parent=1 // pred_fallthru
      _
    // Predicated region
    $region10: #{tpu_custom_call.1} parent=1 // pred_check
      _
    $region11: #{tpu_custom_call.1} parent=1 // pred_check_branch
      %42 = sbr.rel (0) target = $region13
    $region12: #{tpu_custom_call.1} parent=1 // pred_region
      %43 = dma.done [#allocation4], 1024
    $region13: #{tpu_custom_call.1} parent=1 // pred_fallthru
      _
    // Predicated region
    $region14: #{tpu_custom_call.1} parent=1 // pred_check
      _
    $region15: #{tpu_custom_call.1} parent=1 // pred_check_branch
      %45 = sbr.rel (0) target = $region17
    $region16: #{tpu_custom_call.1} parent=1 // pred_region
      %46 = dma.done [#allocation7], 1024
    $region17: #{tpu_custom_call.1} parent=1 // pred_fallthru
      _
    %s47 = sadd.s32 0, 0
    %s48 = smul.u32 16, %s47
    %s49 = sadd.s32 0, 0
    %s50 = smul.u32 16, %s49
    %p52 = scmp.eq.s32.totalorder 0, 0
    // Predicated region
    $region18: #{tpu_custom_call.1} parent=1 // pred_check
      %p53 = pneg %p52
    $region19: #{tpu_custom_call.1} parent=1 // pred_check_branch
      %55 = sbr.rel (%p53) target = $region21
    $region20: #{tpu_custom_call.1} parent=1 // pred_region
      %56 = vst [vmem:[#allocation2] sm:$0xff] 0.0
      %57 = vst [vmem:[#allocation2 + $0x8] sm:$0xff] 0.0
      %58 = vst [vmem:[#allocation2 + $0x10] sm:$0xff] 0.0
      %59 = vst [vmem:[#allocation2 + $0x18] sm:$0xff] 0.0
      %60 = vst [vmem:[#allocation2 + $0x20] sm:$0xff] 0.0
      %61 = vst [vmem:[#allocation2 + $0x28] sm:$0xff] 0.0
      %62 = vst [vmem:[#allocation2 + $0x30] sm:$0xff] 0.0
      %63 = vst [vmem:[#allocation2 + $0x38] sm:$0xff] 0.0
      %64 = vst [vmem:[#allocation2 + $0x40] sm:$0xff] 0.0
      %65 = vst [vmem:[#allocation2 + $0x48] sm:$0xff] 0.0
      %66 = vst [vmem:[#allocation2 + $0x50] sm:$0xff] 0.0
      %67 = vst [vmem:[#allocation2 + $0x58] sm:$0xff] 0.0
      %68 = vst [vmem:[#allocation2 + $0x60] sm:$0xff] 0.0
      %69 = vst [vmem:[#allocation2 + $0x68] sm:$0xff] 0.0
      %70 = vst [vmem:[#allocation2 + $0x70] sm:$0xff] 0.0
      %71 = vst [vmem:[#allocation2 + $0x78] sm:$0xff] 0.0
    $region21: #{tpu_custom_call.1} parent=1 // pred_fallthru
      _
    %v72 = vld [vmem:[#allocation2] sm:$0xff]
    %v73 = vld [vmem:[#allocation2 + $0x8] sm:$0xff]
    %v74 = vld [vmem:[#allocation2 + $0x10] sm:$0xff]
    %v75 = vld [vmem:[#allocation2 + $0x18] sm:$0xff]
    %v76 = vld [vmem:[#allocation2 + $0x20] sm:$0xff]
    %v77 = vld [vmem:[#allocation2 + $0x28] sm:$0xff]
    %v78 = vld [vmem:[#allocation2 + $0x30] sm:$0xff]
    %v79 = vld [vmem:[#allocation2 + $0x38] sm:$0xff]
    %v80 = vld [vmem:[#allocation2 + $0x40] sm:$0xff]
    %v81 = vld [vmem:[#allocation2 + $0x48] sm:$0xff]
    %v82 = vld [vmem:[#allocation2 + $0x50] sm:$0xff]
    %v83 = vld [vmem:[#allocation2 + $0x58] sm:$0xff]
    %v84 = vld [vmem:[#allocation2 + $0x60] sm:$0xff]
    %v85 = vld [vmem:[#allocation2 + $0x68] sm:$0xff]
    %v86 = vld [vmem:[#allocation2 + $0x70] sm:$0xff]
    %v87 = vld [vmem:[#allocation2 + $0x78] sm:$0xff]
    %v88 = vld [vmem:[#allocation3] sm:$0xf]
    %v89 = vld [vmem:[#allocation3 + $0x4] sm:$0xf]
    %v90 = vld [vmem:[#allocation3 + $0x8] sm:$0xf]
    %v91 = vld [vmem:[#allocation3 + $0xc] sm:$0xf]
    %v92 = vld [vmem:[#allocation3 + $0x10] sm:$0xf]
    %v93 = vld [vmem:[#allocation3 + $0x14] sm:$0xf]
    %v94 = vld [vmem:[#allocation3 + $0x18] sm:$0xf]
    %v95 = vld [vmem:[#allocation3 + $0x1c] sm:$0xf]
    %v96 = vld [vmem:[#allocation3 + $0x20] sm:$0xf]
    %v97 = vld [vmem:[#allocation3 + $0x24] sm:$0xf]
    %v98 = vld [vmem:[#allocation3 + $0x28] sm:$0xf]
    %v99 = vld [vmem:[#allocation3 + $0x2c] sm:$0xf]
    %v100 = vld [vmem:[#allocation3 + $0x30] sm:$0xf]
    %v101 = vld [vmem:[#allocation3 + $0x34] sm:$0xf]
    %v102 = vld [vmem:[#allocation3 + $0x38] sm:$0xf]
    %v103 = vld [vmem:[#allocation3 + $0x3c] sm:$0xf]
    %v104 = vld [vmem:[#allocation6] sm:$0xf]
    %v105 = vld [vmem:[#allocation6 + $0x4] sm:$0xf]
    %v106 = vld [vmem:[#allocation6 + $0x8] sm:$0xf]
    %v107 = vld [vmem:[#allocation6 + $0xc] sm:$0xf]
    %v108 = vld [vmem:[#allocation6 + $0x10] sm:$0xf]
    %v109 = vld [vmem:[#allocation6 + $0x14] sm:$0xf]
    %v110 = vld [vmem:[#allocation6 + $0x18] sm:$0xf]
    %v111 = vld [vmem:[#allocation6 + $0x1c] sm:$0xf]
    %v112 = vld [vmem:[#allocation6 + $0x20] sm:$0xf]
    %v113 = vld [vmem:[#allocation6 + $0x24] sm:$0xf]
    %v114 = vld [vmem:[#allocation6 + $0x28] sm:$0xf]
    %v115 = vld [vmem:[#allocation6 + $0x2c] sm:$0xf]
    %v116 = vld [vmem:[#allocation6 + $0x30] sm:$0xf]
    %v117 = vld [vmem:[#allocation6 + $0x34] sm:$0xf]
    %v118 = vld [vmem:[#allocation6 + $0x38] sm:$0xf]
    %v119 = vld [vmem:[#allocation6 + $0x3c] sm:$0xf]
    %v136 = vunpack.c.l.b16 %v88
    %v137 = vunpack.c.l.b16 %v89
    %v138 = vunpack.c.l.b16 %v90
    %v139 = vunpack.c.l.b16 %v91
    %v140 = vunpack.c.l.b16 %v92
    %v141 = vunpack.c.l.b16 %v93
    %v142 = vunpack.c.l.b16 %v94
    %v143 = vunpack.c.l.b16 %v95
    %v144 = vunpack.c.l.b16 %v96
    %v145 = vunpack.c.l.b16 %v97
    %v146 = vunpack.c.l.b16 %v98
    %v147 = vunpack.c.l.b16 %v99
    %v148 = vunpack.c.l.b16 %v100
    %v149 = vunpack.c.l.b16 %v101
    %v150 = vunpack.c.l.b16 %v102
    %v151 = vunpack.c.l.b16 %v103
    %v152 = vpack.c.b16 %v137, %v136
    %v153 = vpack.c.b16 %v139, %v138
    %v154 = vpack.c.b16 %v141, %v140
    %v155 = vpack.c.b16 %v143, %v142
    %v156 = vpack.c.b16 %v145, %v144
    %v157 = vpack.c.b16 %v147, %v146
    %v158 = vpack.c.b16 %v149, %v148
    %v159 = vpack.c.b16 %v151, %v150
    %v184 = vunpack.c.l.b16 %v104
    %v185 = vunpack.c.l.b16 %v105
    %v186 = vunpack.c.l.b16 %v106
    %v187 = vunpack.c.l.b16 %v107
    %v188 = vunpack.c.l.b16 %v108
    %v189 = vunpack.c.l.b16 %v109
    %v190 = vunpack.c.l.b16 %v110
    %v191 = vunpack.c.l.b16 %v111
    %v192 = vunpack.c.l.b16 %v112
    %v193 = vunpack.c.l.b16 %v113
    %v194 = vunpack.c.l.b16 %v114
    %v195 = vunpack.c.l.b16 %v115
    %v196 = vunpack.c.l.b16 %v116
    %v197 = vunpack.c.l.b16 %v117
    %v198 = vunpack.c.l.b16 %v118
    %v199 = vunpack.c.l.b16 %v119
    %v200 = vpack.c.b16 %v185, %v184
    %v201 = vpack.c.b16 %v187, %v186
    %v202 = vpack.c.b16 %v189, %v188
    %v203 = vpack.c.b16 %v191, %v190
    %v204 = vpack.c.b16 %v193, %v192
    %v205 = vpack.c.b16 %v195, %v194
    %v206 = vpack.c.b16 %v197, %v196
    %v207 = vpack.c.b16 %v199, %v198
    %216 = vmatprep.subr.bf16.mxu0 0
    %217 = vmatpush1.bf16.msra.mxu0 %v200
    %218 = vmatprep.subr.bf16.mxu0 0
    %219 = vmatpush1.bf16.msra.mxu0 %v201
    %220 = vmatprep.subr.bf16.mxu0 0
    %221 = vmatpush1.bf16.msra.mxu0 %v202
    %222 = vmatprep.subr.bf16.mxu0 0
    %223 = vmatpush1.bf16.msra.mxu0 %v203
    %224 = vmatprep.subr.bf16.mxu0 0
    %225 = vmatpush1.bf16.msra.mxu0 %v204
    %226 = vmatprep.subr.bf16.mxu0 0
    %227 = vmatpush1.bf16.msra.mxu0 %v205
    %228 = vmatprep.subr.bf16.mxu0 0
    %229 = vmatpush1.bf16.msra.mxu0 %v206
    %230 = vmatprep.subr.bf16.mxu0 0
    %231 = vmatpush1.bf16.msra.mxu0 %v207
    %232 = vmatprep.subr.bf16.mxu0 0
    %233 = vmatpush1.bf16.msra.mxu0 0
    %234 = vmatprep.subr.bf16.mxu0 0
    %235 = vmatpush1.bf16.msra.mxu0 0
    %236 = vmatprep.subr.bf16.mxu0 0
    %237 = vmatpush1.bf16.msra.mxu0 0
    %238 = vmatprep.subr.bf16.mxu0 0
    %239 = vmatpush1.bf16.msra.mxu0 0
    %240 = vmatprep.subr.bf16.mxu0 0
    %241 = vmatpush1.bf16.msra.mxu0 0
    %242 = vmatprep.subr.bf16.mxu0 0
    %243 = vmatpush1.bf16.msra.mxu0 0
    %244 = vmatprep.subr.bf16.mxu0 0
    %245 = vmatpush1.bf16.msra.mxu0 0
    %246 = vmatprep.subr.bf16.mxu0 0
    %247 = vmatpush1.bf16.msra.mxu0 0
    %248 = vmatprep.mubr.bf16.mxu0 0
    %249 = vmatmul.mubr.bf16.gmra.mrb[0].mxu0 %v152
    %v250 = vpop.f32.mrb[0].mxu0
    %v251 = vadd.f32 0.0, %v250
    %v252 = vpop.f32.mrb[0].mxu0
    %v253 = vpop.f32.mrb[0].mxu0
    %v254 = vadd.f32 0.0, %v253
    %v255 = vpop.f32.mrb[0].mxu0
    %256 = vmatprep.mubr.bf16.mxu0 0
    %257 = vmatmul.mubr.bf16.gmra.mrb[0].mxu0 %v153
    %v258 = vpop.f32.mrb[0].mxu0
    %v259 = vadd.f32 0.0, %v258
    %v260 = vpop.f32.mrb[0].mxu0
    %v261 = vpop.f32.mrb[0].mxu0
    %v262 = vadd.f32 0.0, %v261
    %v263 = vpop.f32.mrb[0].mxu0
    %264 = vmatprep.mubr.bf16.mxu0 0
    %265 = vmatmul.mubr.bf16.gmra.mrb[0].mxu0 %v154
    %v266 = vpop.f32.mrb[0].mxu0
    %v267 = vadd.f32 0.0, %v266
    %v268 = vpop.f32.mrb[0].mxu0
    %v269 = vpop.f32.mrb[0].mxu0
    %v270 = vadd.f32 0.0, %v269
    %v271 = vpop.f32.mrb[0].mxu0
    %272 = vmatprep.mubr.bf16.mxu0 0
    %273 = vmatmul.mubr.bf16.gmra.mrb[0].mxu0 %v155
    %v274 = vpop.f32.mrb[0].mxu0
    %v275 = vadd.f32 0.0, %v274
    %v276 = vpop.f32.mrb[0].mxu0
    %v277 = vpop.f32.mrb[0].mxu0
    %v278 = vadd.f32 0.0, %v277
    %v279 = vpop.f32.mrb[0].mxu0
    %280 = vmatprep.mubr.bf16.mxu0 0
    %281 = vmatmul.mubr.bf16.gmra.mrb[0].mxu0 %v156
    %v282 = vpop.f32.mrb[0].mxu0
    %v283 = vadd.f32 0.0, %v282
    %v284 = vpop.f32.mrb[0].mxu0
    %v285 = vpop.f32.mrb[0].mxu0
    %v286 = vadd.f32 0.0, %v285
    %v287 = vpop.f32.mrb[0].mxu0
    %288 = vmatprep.mubr.bf16.mxu0 0
    %289 = vmatmul.mubr.bf16.gmra.mrb[0].mxu0 %v157
    %v290 = vpop.f32.mrb[0].mxu0
    %v291 = vadd.f32 0.0, %v290
    %v292 = vpop.f32.mrb[0].mxu0
    %v293 = vpop.f32.mrb[0].mxu0
    %v294 = vadd.f32 0.0, %v293
    %v295 = vpop.f32.mrb[0].mxu0
    %296 = vmatprep.mubr.bf16.mxu0 0
    %297 = vmatmul.mubr.bf16.gmra.mrb[0].mxu0 %v158
    %v298 = vpop.f32.mrb[0].mxu0
    %v299 = vadd.f32 0.0, %v298
    %v300 = vpop.f32.mrb[0].mxu0
    %v301 = vpop.f32.mrb[0].mxu0
    %v302 = vadd.f32 0.0, %v301
    %v303 = vpop.f32.mrb[0].mxu0
    %304 = vmatprep.mubr.bf16.mxu0 0
    %305 = vmatmul.mubr.bf16.gmra.mrb[0].mxu0 %v159
    %v306 = vpop.f32.mrb[0].mxu0
    %v307 = vadd.f32 0.0, %v306
    %v308 = vpop.f32.mrb[0].mxu0
    %v309 = vpop.f32.mrb[0].mxu0
    %v310 = vadd.f32 0.0, %v309
    %v311 = vpop.f32.mrb[0].mxu0
    %312 = vdwg.mxu0
    %v313 = vadd.f32 %v72, %v251
    %v314 = vadd.f32 %v73, %v254
    %v315 = vadd.f32 %v74, %v259
    %v316 = vadd.f32 %v75, %v262
    %v317 = vadd.f32 %v76, %v267
    %v318 = vadd.f32 %v77, %v270
    %v319 = vadd.f32 %v78, %v275
    %v320 = vadd.f32 %v79, %v278
    %v321 = vadd.f32 %v80, %v283
    %v322 = vadd.f32 %v81, %v286
    %v323 = vadd.f32 %v82, %v291
    %v324 = vadd.f32 %v83, %v294
    %v325 = vadd.f32 %v84, %v299
    %v326 = vadd.f32 %v85, %v302
    %v327 = vadd.f32 %v86, %v307
    %v328 = vadd.f32 %v87, %v310
    %329 = vst [vmem:[#allocation2] sm:$0xff] %v313
    %330 = vst [vmem:[#allocation2 + $0x8] sm:$0xff] %v314
    %331 = vst [vmem:[#allocation2 + $0x10] sm:$0xff] %v315
    %332 = vst [vmem:[#allocation2 + $0x18] sm:$0xff] %v316
    %333 = vst [vmem:[#allocation2 + $0x20] sm:$0xff] %v317
    %334 = vst [vmem:[#allocation2 + $0x28] sm:$0xff] %v318
    %335 = vst [vmem:[#allocation2 + $0x30] sm:$0xff] %v319
    %336 = vst [vmem:[#allocation2 + $0x38] sm:$0xff] %v320
    %337 = vst [vmem:[#allocation2 + $0x40] sm:$0xff] %v321
    %338 = vst [vmem:[#allocation2 + $0x48] sm:$0xff] %v322
    %339 = vst [vmem:[#allocation2 + $0x50] sm:$0xff] %v323
    %340 = vst [vmem:[#allocation2 + $0x58] sm:$0xff] %v324
    %341 = vst [vmem:[#allocation2 + $0x60] sm:$0xff] %v325
    %342 = vst [vmem:[#allocation2 + $0x68] sm:$0xff] %v326
    %343 = vst [vmem:[#allocation2 + $0x70] sm:$0xff] %v327
    %344 = vst [vmem:[#allocation2 + $0x78] sm:$0xff] %v328
    // Predicated region
    $region22: #{tpu_custom_call.1} parent=1 // pred_check
      %p345 = pneg %p52
    $region23: #{tpu_custom_call.1} parent=1 // pred_check_branch
      %347 = sbr.rel (%p345) target = $region25
    $region24: #{tpu_custom_call.1} parent=1 // pred_region
      %v348 = vld [vmem:[#allocation2] sm:$0xff]
      %v349 = vld [vmem:[#allocation2 + $0x8] sm:$0xff]
      %v350 = vld [vmem:[#allocation2 + $0x10] sm:$0xff]
      %v351 = vld [vmem:[#allocation2 + $0x18] sm:$0xff]
      %v352 = vld [vmem:[#allocation2 + $0x20] sm:$0xff]
      %v353 = vld [vmem:[#allocation2 + $0x28] sm:$0xff]
      %v354 = vld [vmem:[#allocation2 + $0x30] sm:$0xff]
      %v355 = vld [vmem:[#allocation2 + $0x38] sm:$0xff]
      %v356 = vld [vmem:[#allocation2 + $0x40] sm:$0xff]
      %v357 = vld [vmem:[#allocation2 + $0x48] sm:$0xff]
      %v358 = vld [vmem:[#allocation2 + $0x50] sm:$0xff]
      %v359 = vld [vmem:[#allocation2 + $0x58] sm:$0xff]
      %v360 = vld [vmem:[#allocation2 + $0x60] sm:$0xff]
      %v361 = vld [vmem:[#allocation2 + $0x68] sm:$0xff]
      %v362 = vld [vmem:[#allocation2 + $0x70] sm:$0xff]
      %v363 = vld [vmem:[#allocation2 + $0x78] sm:$0xff]
      %v364 = vpack.c.bf16 %v349, %v348
      %v365 = vpack.c.bf16 %v351, %v350
      %v366 = vpack.c.bf16 %v353, %v352
      %v367 = vpack.c.bf16 %v355, %v354
      %v368 = vpack.c.bf16 %v357, %v356
      %v369 = vpack.c.bf16 %v359, %v358
      %v370 = vpack.c.bf16 %v361, %v360
      %v371 = vpack.c.bf16 %v363, %v362
      %v380 = vunpack.c.l.b16 %v364
      %v381 = vunpack.c.h.b16 %v364
      %v382 = vunpack.c.l.b16 %v365
      %v383 = vunpack.c.h.b16 %v365
      %v384 = vunpack.c.l.b16 %v366
      %v385 = vunpack.c.h.b16 %v366
      %v386 = vunpack.c.l.b16 %v367
      %v387 = vunpack.c.h.b16 %v367
      %v388 = vunpack.c.l.b16 %v368
      %v389 = vunpack.c.h.b16 %v368
      %v390 = vunpack.c.l.b16 %v369
      %v391 = vunpack.c.h.b16 %v369
      %v392 = vunpack.c.l.b16 %v370
      %v393 = vunpack.c.h.b16 %v370
      %v394 = vunpack.c.l.b16 %v371
      %v395 = vunpack.c.h.b16 %v371
      %v396 = vpack.c.b16 %v380, %v380
      %v397 = vpack.c.b16 %v381, %v381
      %v398 = vpack.c.b16 %v382, %v382
      %v399 = vpack.c.b16 %v383, %v383
      %v400 = vpack.c.b16 %v384, %v384
      %v401 = vpack.c.b16 %v385, %v385
      %v402 = vpack.c.b16 %v386, %v386
      %v403 = vpack.c.b16 %v387, %v387
      %v404 = vpack.c.b16 %v388, %v388
      %v405 = vpack.c.b16 %v389, %v389
      %v406 = vpack.c.b16 %v390, %v390
      %v407 = vpack.c.b16 %v391, %v391
      %v408 = vpack.c.b16 %v392, %v392
      %v409 = vpack.c.b16 %v393, %v393
      %v410 = vpack.c.b16 %v394, %v394
      %v411 = vpack.c.b16 %v395, %v395
      %428 = vst [vmem:[#allocation8] sm:$0xf] %v396
      %429 = vst [vmem:[#allocation8 + $0x4] sm:$0xf] %v397
      %430 = vst [vmem:[#allocation8 + $0x8] sm:$0xf] %v398
      %431 = vst [vmem:[#allocation8 + $0xc] sm:$0xf] %v399
      %432 = vst [vmem:[#allocation8 + $0x10] sm:$0xf] %v400
      %433 = vst [vmem:[#allocation8 + $0x14] sm:$0xf] %v401
      %434 = vst [vmem:[#allocation8 + $0x18] sm:$0xf] %v402
      %435 = vst [vmem:[#allocation8 + $0x1c] sm:$0xf] %v403
      %436 = vst [vmem:[#allocation8 + $0x20] sm:$0xf] %v404
      %437 = vst [vmem:[#allocation8 + $0x24] sm:$0xf] %v405
      %438 = vst [vmem:[#allocation8 + $0x28] sm:$0xf] %v406
      %439 = vst [vmem:[#allocation8 + $0x2c] sm:$0xf] %v407
      %440 = vst [vmem:[#allocation8 + $0x30] sm:$0xf] %v408
      %441 = vst [vmem:[#allocation8 + $0x34] sm:$0xf] %v409
      %442 = vst [vmem:[#allocation8 + $0x38] sm:$0xf] %v410
      %443 = vst [vmem:[#allocation8 + $0x3c] sm:$0xf] %v411
      %v444 = vadd.f32 %v348, %v349
      %v445 = vadd.f32 %v444, %v350
      %v446 = vadd.f32 %v445, %v351
      %v447 = vadd.f32 %v446, %v352
      %v448 = vadd.f32 %v447, %v353
      %v449 = vadd.f32 %v448, %v354
      %v450 = vadd.f32 %v449, %v355
      %v451 = vadd.f32 %v450, %v356
      %v452 = vadd.f32 %v451, %v357
      %v453 = vadd.f32 %v452, %v358
      %v454 = vadd.f32 %v453, %v359
      %v455 = vadd.f32 %v454, %v360
      %v456 = vadd.f32 %v455, %v361
      %v457 = vadd.f32 %v456, %v362
      %v458 = vadd.f32 %v457, %v363
      %v459 = vrot.slane %v458, 4
      %v460 = vadd.f32 %v458, %v459
      %v461 = vrot.slane %v460, 2
      %v462 = vadd.f32 %v460, %v461
      %v463 = vrot.slane %v462, 1
      %v464 = vadd.f32 %v462, %v463
      %v465 = vmul.f32 %v348, %v348
      %v466 = vmul.f32 %v349, %v349
      %v467 = vmul.f32 %v350, %v350
      %v468 = vmul.f32 %v351, %v351
      %v469 = vmul.f32 %v352, %v352
      %v470 = vmul.f32 %v353, %v353
      %v471 = vmul.f32 %v354, %v354
      %v472 = vmul.f32 %v355, %v355
      %v473 = vmul.f32 %v356, %v356
      %v474 = vmul.f32 %v357, %v357
      %v475 = vmul.f32 %v358, %v358
      %v476 = vmul.f32 %v359, %v359
      %v477 = vmul.f32 %v360, %v360
      %v478 = vmul.f32 %v361, %v361
      %v479 = vmul.f32 %v362, %v362
      %v480 = vmul.f32 %v363, %v363
      %v481 = vadd.f32 %v465, %v466
      %v482 = vadd.f32 %v481, %v467
      %v483 = vadd.f32 %v482, %v468
      %v484 = vadd.f32 %v483, %v469
      %v485 = vadd.f32 %v484, %v470
      %v486 = vadd.f32 %v485, %v471
      %v487 = vadd.f32 %v486, %v472
      %v488 = vadd.f32 %v487, %v473
      %v489 = vadd.f32 %v488, %v474
      %v490 = vadd.f32 %v489, %v475
      %v491 = vadd.f32 %v490, %v476
      %v492 = vadd.f32 %v491, %v477
      %v493 = vadd.f32 %v492, %v478
      %v494 = vadd.f32 %v493, %v479
      %v495 = vadd.f32 %v494, %v480
      %v496 = vrot.slane %v495, 4
      %v497 = vadd.f32 %v495, %v496
      %v498 = vrot.slane %v497, 2
      %v499 = vadd.f32 %v497, %v498
      %v500 = vrot.slane %v499, 1
      %v501 = vadd.f32 %v499, %v500
      %p502 = scmp.eq.s32.totalorder 0, 0
      // Predicated region
      $region26: #{tpu_custom_call.1} parent=24 // pred_check
        %p503 = pneg %p502
      $region27: #{tpu_custom_call.1} parent=24 // pred_check_branch
        %505 = sbr.rel (%p503) target = $region29
      $region28: #{tpu_custom_call.1} parent=24 // pred_region
        %506 = vst [vmem:[#allocation9] sm:$0x3] 0.0
      $region29: #{tpu_custom_call.1} parent=24 // pred_fallthru
        _
      %v507 = vld [vmem:[#allocation9] sm:$0x1]
      %v508 = vadd.f32 %v507, %v464
      %509 = vst [vmem:[#allocation9] sm:$0x1] %v508
      %v510 = vld [vmem:[#allocation9 + $0x1] sm:$0x1]
      %v511 = vadd.f32 %v510, %v501
      %512 = vst [vmem:[#allocation9 + $0x1] sm:$0x1] %v511
    $region25: #{tpu_custom_call.1} parent=1 // pred_fallthru
      _
    // Predicated region
    $region30: #{tpu_custom_call.1} parent=1 // pred_check
      _
    $region31: #{tpu_custom_call.1} parent=1 // pred_check_branch
      %514 = sbr.rel (0) target = $region33
    $region32: #{tpu_custom_call.1} parent=1 // pred_region
      %s515 = sadd.s32 0, 0
      %s516 = smul.u32 16, %s515
      %s518 = ssub.s32 1024, 1024
      %519 = vsyncadd [#allocation5], %s518
      %s520 = smul.addr %s516, 64
      %s521 = scalar_lea.hbm %s2, %s520
      %s522 = sshll.u32 [#allocation8], 4
      %s523 = int_to_ptr.vmem [resolvable:$true] %s522
      %528 = dma.vmem_to_hbm [thread:$0]  %s523, 1024, %s521, [#allocation5], 64, 64, 4
    $region33: #{tpu_custom_call.1} parent=1 // pred_fallthru
      _
    // Predicated region
    $region34: #{tpu_custom_call.1} parent=1 // pred_check
      _
    $region35: #{tpu_custom_call.1} parent=1 // pred_check_branch
      %530 = sbr.rel (0) target = $region37
    $region36: #{tpu_custom_call.1} parent=1 // pred_region
      %s532 = ssub.s32 32, 32
      %533 = vsyncadd [#allocation10], %s532
      %s535 = sshll.u32 [#allocation9], 4
      %s536 = int_to_ptr.vmem [resolvable:$true] %s535
      %538 = dma.vmem_to_hbm [thread:$0]  %s536, 32, %s3, [#allocation10]
    $region37: #{tpu_custom_call.1} parent=1 // pred_fallthru
      _
    // Predicated region
    $region38: #{tpu_custom_call.1} parent=1 // pred_check
      _
    $region39: #{tpu_custom_call.1} parent=1 // pred_check_branch
      %540 = sbr.rel (0) target = $region41
    $region40: #{tpu_custom_call.1} parent=1 // pred_region
      %541 = dma.done [#allocation5], 1024
    $region41: #{tpu_custom_call.1} parent=1 // pred_fallthru
      _
    // Predicated region
    $region42: #{tpu_custom_call.1} parent=1 // pred_check
      _
    $region43: #{tpu_custom_call.1} parent=1 // pred_check_branch
      %543 = sbr.rel (0) target = $region45
    $region44: #{tpu_custom_call.1} parent=1 // pred_region
      %544 = dma.done [#allocation10], 32
    $region45: #{tpu_custom_call.1} parent=1 // pred_fallthru
      _
    %545 = vsyncpa [#allocation4], 1
    %546 = vsyncpa [#allocation7], 1
    %547 = vsyncpa [#allocation5], 1
    %548 = vsyncpa [#allocation10], 1

</llo_original>
